<compile_context>
chip_gen: v7x
topology: tpu7x:2x2x1
jax: 0.10.0
libtpu: 0.0.40
codegen_flags: <defaults>
</compile_context>

<pallas_src>
import math

import numpy as np
import jax
import jax.numpy as jnp
from jax.experimental import pallas as pl
from jax.experimental.pallas import tpu as pltpu


def _choose_batch_tile(n_batch, hout, target_m=256):
    """How many batch elements to fold into one grid step (rows of the MXU M dim).

    Aim for >= target_m rows per matmul (fills a 256-row MXU on v6e/v7x); when the
    batch is large enough, keep at least two grid steps so a 2-TC part (v7x) can use
    both cores and the input pipeline has depth.  Result must divide n_batch.
    """
    want = max(1, -(-target_m // hout))                      # ceil(target_m / hout)
    cand = want if n_batch >= 2 * want else min(n_batch, want)
    for bt in range(cand, 0, -1):
        if n_batch % bt == 0:
            return bt
    return 1


def _make_kernel_stacked(KH, B_TILE, H, HOUT, HPAD, WCIN, NOUT, PH_LO, PH_HI):
    """SH == 1 fast path.

    The B_TILE H-padded elements are stacked row-wise in one VMEM scratch, so every
    kh-tap LHS is a single contiguous row-offset slice and the matmul M dimension
    covers the whole batch tile.  Rows [b*HPAD, b*HPAD+HOUT) of the accumulator are
    element b's outputs; the (KH-1) rows in between are never stored.
    """
    MROWS = (B_TILE - 1) * HPAD + HOUT        # last needed "virtual output" row + 1

    def kernel(x_ref, w_ref, b_ref, o_ref, xpad_ref):
        # ---- stack the H-padded inputs: zero pad rows + interior copy per element ----
        for b in range(B_TILE):
            base = b * HPAD
            if PH_LO > 0:
                xpad_ref[base:base + PH_LO, :] = jnp.zeros((PH_LO, WCIN), xpad_ref.dtype)
            if PH_HI > 0:
                xpad_ref[base + PH_LO + H:base + HPAD, :] = jnp.zeros(
                    (PH_HI, WCIN), xpad_ref.dtype)
            xpad_ref[base + PH_LO:base + PH_LO + H, :] = x_ref[b]
        # TODO(synk): for large H*WCIN, take x via memory_space=pl.ANY and DMA it
        #             straight into xpad_ref (skips this VMEM->VMEM interior pass).

        # ---- KH matmuls, (MROWS, W*CIN) x (W*CIN, WOUT*COUT), f32 accumulation ----
        acc = jnp.broadcast_to(b_ref[...], (MROWS, NOUT)).astype(jnp.float32)
        for kh in range(KH):                   # static unroll over kernel rows
            acc = acc + jnp.dot(xpad_ref[kh:kh + MROWS, :], w_ref[kh],
                                preferred_element_type=jnp.float32)

        # ---- lane-dense (HOUT, WOUT*COUT) stores per element ----
        for b in range(B_TILE):
            o_ref[b] = acc[b * HPAD:b * HPAD + HOUT, :].astype(o_ref.dtype)

    return kernel


def _make_kernel_strided(KH, SH, B_TILE, H, HOUT, HPAD, WCIN, NOUT, PH_LO, PH_HI):
    """SH > 1 fallback: per-element matmuls with a strided row window.

    TODO(synk): deinterleave rows by stride phase at copy time so every kh read is a
                contiguous vld, and stack elements into one matmul like the SH==1 path.
    """
    def kernel(x_ref, w_ref, b_ref, o_ref, xpad_ref):
        for b in range(B_TILE):
            if PH_LO > 0:
                xpad_ref[b, 0:PH_LO, :] = jnp.zeros((PH_LO, WCIN), xpad_ref.dtype)
            if PH_HI > 0:
                xpad_ref[b, PH_LO + H:HPAD, :] = jnp.zeros((PH_HI, WCIN), xpad_ref.dtype)
            xpad_ref[b, PH_LO:PH_LO + H, :] = x_ref[b]
        for b in range(B_TILE):
            acc = jnp.broadcast_to(b_ref[...], (HOUT, NOUT)).astype(jnp.float32)
            for kh in range(KH):
                lhs = xpad_ref[b, pl.ds(kh, HOUT, stride=SH), :]
                acc = acc + jnp.dot(lhs, w_ref[kh], preferred_element_type=jnp.float32)
            o_ref[b] = acc.astype(o_ref.dtype)

    return kernel


def _build_banded_weight(weight_oihw, W, WOUT, SW, pw_lo, dtype):
    """Fold KW taps and W-direction 'same' zero padding into (KH, W*CIN, WOUT*COUT).

    Exact: each (input column q, output column w) pair selects at most one kw tap.
    TODO(synk): for production W, fold KW only within a WOUT tile (KW-1 column halo) so
                the weight scales O(KH*KW*CIN*COUT*WOUTtile) instead of O(W*WOUT),
                wasted MXU FLOPs stay bounded, and NOUT per tile can be sized to a
                multiple of 256 (v6e/v7x) / 128 (v5e).
    """
    COUT, CIN, KH, KW = weight_oihw.shape
    wt = jnp.transpose(weight_oihw, (2, 3, 1, 0)).astype(jnp.float32)  # (KH,KW,CIN,COUT)
    sel = np.zeros((KW, W, WOUT), np.float32)
    for kw in range(KW):
        for w in range(WOUT):
            q = w * SW + kw - pw_lo
            if 0 <= q < W:
                sel[kw, q, w] = 1.0
    sel = jnp.asarray(sel)
    # wbig[kh, q*CIN+ci, w*COUT+co] = sum_kw sel[kw,q,w] * wt[kh,kw,ci,co]
    wbig = jnp.einsum('xqw,hxio->hqiwo', sel, wt)
    return wbig.reshape(KH, W * CIN, WOUT * COUT).astype(dtype)


def signal_conv2d_same_nhwc(x_nhwc, weight_oihw, bias, stride=(1, 1),
                            compute_dtype=jnp.bfloat16, batch_tile=None):
    """NHWC-native SignalConvND(ndim=2, padding='same', transpose=False) forward.

    Returns (N, HOUT, WOUT, COUT) in x's dtype.  Matmuls run in `compute_dtype`
    (bf16 by default — MXU native on v5e/v6e/v7x) with f32 accumulation.
    """
    N, H, W, CIN = x_nhwc.shape
    COUT, CIN_w, KH, KW = weight_oihw.shape
    assert CIN == CIN_w
    SH, SW = stride

    # 'same' padding exactly as the PyTorch module (_get_pad / _pad_input)
    ph, pw = max(KH - SH, 0), max(KW - SW, 0)
    ph_lo, ph_hi = ph // 2, ph - ph // 2
    pw_lo = pw // 2
    HOUT = (H + ph - KH) // SH + 1
    WOUT = (W + pw - KW) // SW + 1
    HPAD = H + ph
    WCIN = W * CIN
    NOUT = WOUT * COUT
    out_dtype = x_nhwc.dtype

    if batch_tile is None:
        batch_tile = _choose_batch_tile(N, HOUT)
    B_TILE = batch_tile
    assert N % B_TILE == 0, (N, B_TILE)
    grid = (N // B_TILE,)

    wbig = _build_banded_weight(weight_oihw, W, WOUT, SW, pw_lo, compute_dtype)
    b_tiled = jnp.tile(bias.astype(jnp.float32).reshape(1, COUT), (1, WOUT))  # (1,NOUT)
    # Row-major reshape (W, CIN) -> W*CIN is free; keeps channels on the lane axis.
    x3 = x_nhwc.reshape(N, H, WCIN).astype(compute_dtype)

    if SH == 1:
        kernel = _make_kernel_stacked(KH, B_TILE, H, HOUT, HPAD, WCIN, NOUT, ph_lo, ph_hi)
        scratch = pltpu.VMEM((B_TILE * HPAD, WCIN), compute_dtype)
    else:
        kernel = _make_kernel_strided(KH, SH, B_TILE, H, HOUT, HPAD, WCIN, NOUT,
                                      ph_lo, ph_hi)
        scratch = pltpu.VMEM((B_TILE, HPAD, WCIN), compute_dtype)

    cbytes = jnp.dtype(compute_dtype).itemsize
    obytes = jnp.dtype(out_dtype).itemsize
    vmem_est = (2 * B_TILE * H * WCIN * cbytes          # double-buffered input blocks
                + 2 * B_TILE * HOUT * NOUT * obytes     # double-buffered output blocks
                + KH * WCIN * NOUT * cbytes             # resident banded weight
                + NOUT * 4                              # resident bias (f32)
                + B_TILE * HPAD * WCIN * cbytes)        # padded staging scratch
    # Explicit scoped-VMEM request with headroom, capped at v7x's 64 MiB physical VMEM.
    vmem_limit = int(min(max(2 * vmem_est, 16 << 20), 64 << 20))

    def _run(resident_kwargs):
        return pl.pallas_call(
            kernel,
            out_shape=jax.ShapeDtypeStruct((N, HOUT, NOUT), out_dtype),
            grid=grid,
            in_specs=[
                pl.BlockSpec((B_TILE, H, WCIN), lambda n: (n, 0, 0)),
                pl.BlockSpec((KH, WCIN, NOUT), lambda n: (0, 0, 0), **resident_kwargs),
                pl.BlockSpec((1, NOUT), lambda n: (0, 0), **resident_kwargs),
            ],
            out_specs=pl.BlockSpec((B_TILE, HOUT, NOUT), lambda n: (n, 0, 0)),
            scratch_shapes=[scratch],
            compiler_params=pltpu.CompilerParams(
                dimension_semantics=("parallel",),
                vmem_limit_bytes=vmem_limit),
        )(x3, wbig, b_tiled)

    try:
        # Weight/bias index_maps are constant -> single-buffer them so their VMEM
        # footprint is not doubled by the pipeline (matters on v7x at production sizes).
        out3 = _run(dict(pipeline_mode=pl.Buffered(1)))
    except Exception:
        out3 = _run({})   # jax version without BlockSpec(pipeline_mode=...): default 2x

    return out3.reshape(N, HOUT, WOUT, COUT)


def signal_conv2d_same(x_nchw, weight_oihw, bias, stride=(1, 1),
                       compute_dtype=jnp.bfloat16, batch_tile=None):
    """PyTorch-convention NCHW wrapper of SignalConvND(ndim=2, padding='same').

    NOTE: the two transposes here are full HBM relayout passes; prefer calling
    signal_conv2d_same_nhwc end-to-end in production pipelines.
    """
    x_nhwc = jnp.transpose(x_nchw, (0, 2, 3, 1))
    out_nhwc = signal_conv2d_same_nhwc(x_nhwc, weight_oihw, bias, stride=stride,
                                       compute_dtype=compute_dtype, batch_tile=batch_tile)
    return jnp.transpose(out_nhwc, (0, 3, 1, 2))


def init_params(key, in_channels, out_channels, kernel_size):
    """Xavier-uniform weight + zero bias (matches the module's __init__)."""
    KH, KW = kernel_size
    fan_in = in_channels * KH * KW
    fan_out = out_channels * KH * KW
    bound = math.sqrt(6.0 / (fan_in + fan_out))
    weight = jax.random.uniform(
        key, (out_channels, in_channels, KH, KW),
        minval=-bound, maxval=bound, dtype=jnp.float32)
    bias = jnp.zeros((out_channels,), jnp.float32)
    return weight, bias


if __name__ == "__main__":
    # SignalConvND(ndim=2, in_channels=4, out_channels=8, kernel_size=3, stride=1,
    #              padding='same', transpose=False, bias=True, activation=None)
    key = jax.random.PRNGKey(0)
    kx, kwt, kb = jax.random.split(key, 3)

    N, CIN, H, W = 2, 4, 16, 16
    COUT, KH, KW = 8, 3, 3
    stride = (1, 1)

    x = jax.random.normal(kx, (N, CIN, H, W), dtype=jnp.float32)
    weight, _zero_bias = init_params(kwt, CIN, COUT, (KH, KW))
    # Nonzero bias to actually exercise the bias path (module init is zeros).
    bias = 0.1 * jax.random.normal(kb, (COUT,), dtype=jnp.float32)

    out = signal_conv2d_same(x, weight, bias, stride=stride)
    out = jax.block_until_ready(out)

    # Pure-JAX reference (f32): the module's explicit 'same' padding + VALID conv.
    ph_, pw_ = max(KH - stride[0], 0), max(KW - stride[1], 0)
    x_pad = jnp.pad(
        x, ((0, 0), (0, 0), (ph_ // 2, ph_ - ph_ // 2), (pw_ // 2, pw_ - pw_ // 2)))
    ref = jax.lax.conv_general_dilated(
        x_pad, weight, window_strides=stride, padding="VALID",
        dimension_numbers=("NCHW", "OIHW", "NCHW"),
    ) + bias[None, :, None, None]

    assert out.shape == ref.shape == (N, COUT, H, W)
    err = float(jnp.max(jnp.abs(out - ref)))
    # bf16 inputs/weights with f32 accumulation -> ~1e-2 absolute tolerance.
    assert err < 3e-2, f"max abs err = {err}"

    print("KERNEL_OK")
</pallas_src>

<mosaic_0001>
module attributes {stable_mosaic.version = 11 : i64} {
  func.func @kernel(%arg0: i32, %arg1: memref<2x16x64xbf16, #tpu.memory_space<vmem>>, %arg2: memref<3x64x128xbf16, #tpu.memory_space<vmem>>, %arg3: memref<1x128xf32, #tpu.memory_space<vmem>>, %arg4: memref<2x16x128xf32, #tpu.memory_space<vmem>>, %arg5: memref<36x64xbf16, #tpu.memory_space<vmem>>) attributes {dimension_semantics = [#tpu.dimension_semantics<parallel>], iteration_bounds = array<i64: 1>, scalar_prefetch = 0 : i64, scratch_operands = 1 : i64, tpu.core_type = #tpu.core_type<tc>, window_params = [{transform_indices = @transform_0, window_bounds = array<i64: 2, 16, 64>}, {pipeline_mode = #tpu.pipeline_mode<synchronous>, transform_indices = @transform_1, window_bounds = array<i64: 3, 64, 128>}, {pipeline_mode = #tpu.pipeline_mode<synchronous>, transform_indices = @transform_2, window_bounds = array<i64: 1, 128>}, {transform_indices = @transform_3, window_bounds = array<i64: 2, 16, 128>}]} {
    %cst = arith.constant 0.000000e+00 : bf16
    %0 = vector.broadcast %cst : bf16 to vector<1x64xbf16>
    %c0 = arith.constant 0 : index
    %c0_0 = arith.constant 0 : index
    %1 = vector.load %arg5[%c0, %c0_0] : memref<36x64xbf16, #tpu.memory_space<vmem>>, vector<1x64xbf16>
    tpu.vector_store %arg5[%c0, %c0_0], %0 {strides = array<i32>} : memref<36x64xbf16, #tpu.memory_space<vmem>>, vector<1x64xbf16>,
    %cst_1 = arith.constant 0.000000e+00 : bf16
    %2 = vector.broadcast %cst_1 : bf16 to vector<1x64xbf16>
    %c17 = arith.constant 17 : index
    %c0_2 = arith.constant 0 : index
    %3 = vector.load %arg5[%c17, %c0_2] : memref<36x64xbf16, #tpu.memory_space<vmem>>, vector<1x64xbf16>
    tpu.vector_store %arg5[%c17, %c0_2], %2 {strides = array<i32>} : memref<36x64xbf16, #tpu.memory_space<vmem>>, vector<1x64xbf16>,
    %c0_3 = arith.constant 0 : index
    %c0_4 = arith.constant 0 : index
    %c0_5 = arith.constant 0 : index
    %4 = vector.load %arg1[%c0_3, %c0_4, %c0_5] : memref<2x16x64xbf16, #tpu.memory_space<vmem>>, vector<1x16x64xbf16>
    %5 = vector.shape_cast %4 : vector<1x16x64xbf16> to vector<16x64xbf16>
    %c1 = arith.constant 1 : index
    %c0_6 = arith.constant 0 : index
    %6 = vector.load %arg5[%c1, %c0_6] : memref<36x64xbf16, #tpu.memory_space<vmem>>, vector<16x64xbf16>
    tpu.vector_store %arg5[%c1, %c0_6], %5 {strides = array<i32>} : memref<36x64xbf16, #tpu.memory_space<vmem>>, vector<16x64xbf16>,
    %cst_7 = arith.constant 0.000000e+00 : bf16
    %7 = vector.broadcast %cst_7 : bf16 to vector<1x64xbf16>
    %c18 = arith.constant 18 : index
    %c0_8 = arith.constant 0 : index
    %8 = vector.load %arg5[%c18, %c0_8] : memref<36x64xbf16, #tpu.memory_space<vmem>>, vector<1x64xbf16>
    tpu.vector_store %arg5[%c18, %c0_8], %7 {strides = array<i32>} : memref<36x64xbf16, #tpu.memory_space<vmem>>, vector<1x64xbf16>,
    %cst_9 = arith.constant 0.000000e+00 : bf16
    %9 = vector.broadcast %cst_9 : bf16 to vector<1x64xbf16>
    %c35 = arith.constant 35 : index
    %c0_10 = arith.constant 0 : index
    %10 = vector.load %arg5[%c35, %c0_10] : memref<36x64xbf16, #tpu.memory_space<vmem>>, vector<1x64xbf16>
    tpu.vector_store %arg5[%c35, %c0_10], %9 {strides = array<i32>} : memref<36x64xbf16, #tpu.memory_space<vmem>>, vector<1x64xbf16>,
    %c1_11 = arith.constant 1 : index
    %c0_12 = arith.constant 0 : index
    %c0_13 = arith.constant 0 : index
    %11 = vector.load %arg1[%c1_11, %c0_12, %c0_13] : memref<2x16x64xbf16, #tpu.memory_space<vmem>>, vector<1x16x64xbf16>
    %12 = vector.shape_cast %11 : vector<1x16x64xbf16> to vector<16x64xbf16>
    %c19 = arith.constant 19 : index
    %c0_14 = arith.constant 0 : index
    %13 = vector.load %arg5[%c19, %c0_14] : memref<36x64xbf16, #tpu.memory_space<vmem>>, vector<16x64xbf16>
    tpu.vector_store %arg5[%c19, %c0_14], %12 {strides = array<i32>} : memref<36x64xbf16, #tpu.memory_space<vmem>>, vector<16x64xbf16>,
    %c0_15 = arith.constant 0 : index
    %c0_16 = arith.constant 0 : index
    %14 = vector.load %arg3[%c0_15, %c0_16] : memref<1x128xf32, #tpu.memory_space<vmem>>, vector<1x128xf32>
    %15 = vector.shape_cast %14 : vector<1x128xf32> to vector<1x128xf32>
    %16 = vector.broadcast %15 : vector<1x128xf32> to vector<34x128xf32>
    %c0_17 = arith.constant 0 : index
    %c0_18 = arith.constant 0 : index
    %17 = vector.load %arg5[%c0_17, %c0_18] : memref<36x64xbf16, #tpu.memory_space<vmem>>, vector<34x64xbf16>
    %c0_19 = arith.constant 0 : index
    %c0_20 = arith.constant 0 : index
    %c0_21 = arith.constant 0 : index
    %18 = vector.load %arg2[%c0_19, %c0_20, %c0_21] : memref<3x64x128xbf16, #tpu.memory_space<vmem>>, vector<1x64x128xbf16>
    %19 = vector.shape_cast %18 : vector<1x64x128xbf16> to vector<64x128xbf16>
    %cst_22 = arith.constant dense<0.000000e+00> : vector<34x128xf32>
    %20 = tpu.matmul %17, %19, %cst_22 {dimension_numbers = #tpu.dot_dimension_numbers<[1], [0], [0], [1], [0, 0, 1, 1], [], []>} : vector<34x64xbf16>, vector<64x128xbf16>, vector<34x128xf32> -> vector<34x128xf32>
    %21 = arith.addf %16, %20 : vector<34x128xf32>
    %c1_23 = arith.constant 1 : index
    %c0_24 = arith.constant 0 : index
    %22 = vector.load %arg5[%c1_23, %c0_24] : memref<36x64xbf16, #tpu.memory_space<vmem>>, vector<34x64xbf16>
    %c1_25 = arith.constant 1 : index
    %c0_26 = arith.constant 0 : index
    %c0_27 = arith.constant 0 : index
    %23 = vector.load %arg2[%c1_25, %c0_26, %c0_27] : memref<3x64x128xbf16, #tpu.memory_space<vmem>>, vector<1x64x128xbf16>
    %24 = vector.shape_cast %23 : vector<1x64x128xbf16> to vector<64x128xbf16>
    %cst_28 = arith.constant dense<0.000000e+00> : vector<34x128xf32>
    %25 = tpu.matmul %22, %24, %cst_28 {dimension_numbers = #tpu.dot_dimension_numbers<[1], [0], [0], [1], [0, 0, 1, 1], [], []>} : vector<34x64xbf16>, vector<64x128xbf16>, vector<34x128xf32> -> vector<34x128xf32>
    %26 = arith.addf %21, %25 : vector<34x128xf32>
    %c2 = arith.constant 2 : index
    %c0_29 = arith.constant 0 : index
    %27 = vector.load %arg5[%c2, %c0_29] : memref<36x64xbf16, #tpu.memory_space<vmem>>, vector<34x64xbf16>
    %c2_30 = arith.constant 2 : index
    %c0_31 = arith.constant 0 : index
    %c0_32 = arith.constant 0 : index
    %28 = vector.load %arg2[%c2_30, %c0_31, %c0_32] : memref<3x64x128xbf16, #tpu.memory_space<vmem>>, vector<1x64x128xbf16>
    %29 = vector.shape_cast %28 : vector<1x64x128xbf16> to vector<64x128xbf16>
    %cst_33 = arith.constant dense<0.000000e+00> : vector<34x128xf32>
    %30 = tpu.matmul %27, %29, %cst_33 {dimension_numbers = #tpu.dot_dimension_numbers<[1], [0], [0], [1], [0, 0, 1, 1], [], []>} : vector<34x64xbf16>, vector<64x128xbf16>, vector<34x128xf32> -> vector<34x128xf32>
    %31 = arith.addf %26, %30 : vector<34x128xf32>
    %32 = vector.extract_strided_slice %31 {offsets = [0, 0], sizes = [16, 128], strides = [1, 1]} : vector<34x128xf32> to vector<16x128xf32>
    %c0_34 = arith.constant 0 : index
    %c0_35 = arith.constant 0 : index
    %c0_36 = arith.constant 0 : index
    %33 = vector.load %arg4[%c0_34, %c0_35, %c0_36] : memref<2x16x128xf32, #tpu.memory_space<vmem>>, vector<1x16x128xf32>
    %34 = vector.shape_cast %33 : vector<1x16x128xf32> to vector<16x128xf32>
    %35 = vector.shape_cast %32 : vector<16x128xf32> to vector<1x16x128xf32>
    tpu.vector_store %arg4[%c0_34, %c0_35, %c0_36], %35 {strides = array<i32>} : memref<2x16x128xf32, #tpu.memory_space<vmem>>, vector<1x16x128xf32>,
    %36 = vector.extract_strided_slice %31 {offsets = [18, 0], sizes = [16, 128], strides = [1, 1]} : vector<34x128xf32> to vector<16x128xf32>
    %c1_37 = arith.constant 1 : index
    %c0_38 = arith.constant 0 : index
    %c0_39 = arith.constant 0 : index
    %37 = vector.load %arg4[%c1_37, %c0_38, %c0_39] : memref<2x16x128xf32, #tpu.memory_space<vmem>>, vector<1x16x128xf32>
    %38 = vector.shape_cast %37 : vector<1x16x128xf32> to vector<16x128xf32>
    %39 = vector.shape_cast %36 : vector<16x128xf32> to vector<1x16x128xf32>
    tpu.vector_store %arg4[%c1_37, %c0_38, %c0_39], %39 {strides = array<i32>} : memref<2x16x128xf32, #tpu.memory_space<vmem>>, vector<1x16x128xf32>,
    return
  }
  func.func @transform_0(%arg0: i32) -> (i32, i32, i32) {
    %c0_i32 = arith.constant 0 : i32
    %c0_i32_0 = arith.constant 0 : i32
    %c0_i32_1 = arith.constant 0 : i32
    return %arg0, %c0_i32, %c0_i32_0 : i32, i32, i32
  }
  func.func @transform_1(%arg0: i32) -> (i32, i32, i32) {
    %c0_i32 = arith.constant 0 : i32
    %c0_i32_0 = arith.constant 0 : i32
    %c0_i32_1 = arith.constant 0 : i32
    %c0_i32_2 = arith.constant 0 : i32
    return %c0_i32, %c0_i32_0, %c0_i32_1 : i32, i32, i32
  }
  func.func @transform_2(%arg0: i32) -> (i32, i32) {
    %c0_i32 = arith.constant 0 : i32
    %c0_i32_0 = arith.constant 0 : i32
    %c0_i32_1 = arith.constant 0 : i32
    return %c0_i32, %c0_i32_0 : i32, i32
  }
  func.func @transform_3(%arg0: i32) -> (i32, i32, i32) {
    %c0_i32 = arith.constant 0 : i32
    %c0_i32_0 = arith.constant 0 : i32
    %c0_i32_1 = arith.constant 0 : i32
    return %arg0, %c0_i32, %c0_i32_0 : i32, i32, i32
  }
}

module attributes {stable_mosaic.version = 11 : i64} {
  func.func @kernel(%arg0: i32, %arg1: memref<2x16x64xbf16, #tpu.memory_space<vmem>>, %arg2: memref<3x64x128xbf16, #tpu.memory_space<vmem>>, %arg3: memref<1x128xf32, #tpu.memory_space<vmem>>, %arg4: memref<2x16x128xf32, #tpu.memory_space<vmem>>, %arg5: memref<36x64xbf16, #tpu.memory_space<vmem>>) attributes {dimension_semantics = [#tpu.dimension_semantics<parallel>], iteration_bounds = array<i64: 1>, scalar_prefetch = 0 : i64, scratch_operands = 1 : i64, tpu.core_type = #tpu.core_type<tc>, window_params = [{transform_indices = @transform_0, window_bounds = array<i64: 2, 16, 64>}, {pipeline_mode = #tpu.pipeline_mode<synchronous>, transform_indices = @transform_1, window_bounds = array<i64: 3, 64, 128>}, {pipeline_mode = #tpu.pipeline_mode<synchronous>, transform_indices = @transform_2, window_bounds = array<i64: 1, 128>}, {transform_indices = @transform_3, window_bounds = array<i64: 2, 16, 128>}]} {
    %cst = arith.constant 0.000000e+00 : bf16
    %0 = vector.broadcast %cst : bf16 to vector<1x64xbf16>
    %c0 = arith.constant 0 : index
    %c0_0 = arith.constant 0 : index
    %1 = vector.load %arg5[%c0, %c0_0] : memref<36x64xbf16, #tpu.memory_space<vmem>>, vector<1x64xbf16>
    tpu.vector_store %arg5[%c0, %c0_0], %0 {strides = array<i32>} : memref<36x64xbf16, #tpu.memory_space<vmem>>, vector<1x64xbf16>,
    %cst_1 = arith.constant 0.000000e+00 : bf16
    %2 = vector.broadcast %cst_1 : bf16 to vector<1x64xbf16>
    %c17 = arith.constant 17 : index
    %c0_2 = arith.constant 0 : index
    %3 = vector.load %arg5[%c17, %c0_2] : memref<36x64xbf16, #tpu.memory_space<vmem>>, vector<1x64xbf16>
    tpu.vector_store %arg5[%c17, %c0_2], %2 {strides = array<i32>} : memref<36x64xbf16, #tpu.memory_space<vmem>>, vector<1x64xbf16>,
    %c0_3 = arith.constant 0 : index
    %c0_4 = arith.constant 0 : index
    %c0_5 = arith.constant 0 : index
    %4 = vector.load %arg1[%c0_3, %c0_4, %c0_5] : memref<2x16x64xbf16, #tpu.memory_space<vmem>>, vector<1x16x64xbf16>
    %5 = vector.shape_cast %4 : vector<1x16x64xbf16> to vector<16x64xbf16>
    %c1 = arith.constant 1 : index
    %c0_6 = arith.constant 0 : index
    %6 = vector.load %arg5[%c1, %c0_6] : memref<36x64xbf16, #tpu.memory_space<vmem>>, vector<16x64xbf16>
    tpu.vector_store %arg5[%c1, %c0_6], %5 {strides = array<i32>} : memref<36x64xbf16, #tpu.memory_space<vmem>>, vector<16x64xbf16>,
    %cst_7 = arith.constant 0.000000e+00 : bf16
    %7 = vector.broadcast %cst_7 : bf16 to vector<1x64xbf16>
    %c18 = arith.constant 18 : index
    %c0_8 = arith.constant 0 : index
    %8 = vector.load %arg5[%c18, %c0_8] : memref<36x64xbf16, #tpu.memory_space<vmem>>, vector<1x64xbf16>
    tpu.vector_store %arg5[%c18, %c0_8], %7 {strides = array<i32>} : memref<36x64xbf16, #tpu.memory_space<vmem>>, vector<1x64xbf16>,
    %cst_9 = arith.constant 0.000000e+00 : bf16
    %9 = vector.broadcast %cst_9 : bf16 to vector<1x64xbf16>
    %c35 = arith.constant 35 : index
    %c0_10 = arith.constant 0 : index
    %10 = vector.load %arg5[%c35, %c0_10] : memref<36x64xbf16, #tpu.memory_space<vmem>>, vector<1x64xbf16>
    tpu.vector_store %arg5[%c35, %c0_10], %9 {strides = array<i32>} : memref<36x64xbf16, #tpu.memory_space<vmem>>, vector<1x64xbf16>,
    %c1_11 = arith.constant 1 : index
    %c0_12 = arith.constant 0 : index
    %c0_13 = arith.constant 0 : index
    %11 = vector.load %arg1[%c1_11, %c0_12, %c0_13] : memref<2x16x64xbf16, #tpu.memory_space<vmem>>, vector<1x16x64xbf16>
    %12 = vector.shape_cast %11 : vector<1x16x64xbf16> to vector<16x64xbf16>
    %c19 = arith.constant 19 : index
    %c0_14 = arith.constant 0 : index
    %13 = vector.load %arg5[%c19, %c0_14] : memref<36x64xbf16, #tpu.memory_space<vmem>>, vector<16x64xbf16>
    tpu.vector_store %arg5[%c19, %c0_14], %12 {strides = array<i32>} : memref<36x64xbf16, #tpu.memory_space<vmem>>, vector<16x64xbf16>,
    %c0_15 = arith.constant 0 : index
    %c0_16 = arith.constant 0 : index
    %14 = vector.load %arg3[%c0_15, %c0_16] : memref<1x128xf32, #tpu.memory_space<vmem>>, vector<1x128xf32>
    %15 = vector.shape_cast %14 : vector<1x128xf32> to vector<1x128xf32>
    %16 = vector.broadcast %15 : vector<1x128xf32> to vector<34x128xf32>
    %c0_17 = arith.constant 0 : index
    %c0_18 = arith.constant 0 : index
    %17 = vector.load %arg5[%c0_17, %c0_18] : memref<36x64xbf16, #tpu.memory_space<vmem>>, vector<34x64xbf16>
    %c0_19 = arith.constant 0 : index
    %c0_20 = arith.constant 0 : index
    %c0_21 = arith.constant 0 : index
    %18 = vector.load %arg2[%c0_19, %c0_20, %c0_21] : memref<3x64x128xbf16, #tpu.memory_space<vmem>>, vector<1x64x128xbf16>
    %19 = vector.shape_cast %18 : vector<1x64x128xbf16> to vector<64x128xbf16>
    %cst_22 = arith.constant dense<0.000000e+00> : vector<34x128xf32>
    %20 = tpu.matmul %17, %19, %cst_22 {dimension_numbers = #tpu.dot_dimension_numbers<[1], [0], [0], [1], [0, 0, 1, 1], [], []>} : vector<34x64xbf16>, vector<64x128xbf16>, vector<34x128xf32> -> vector<34x128xf32>
    %21 = arith.addf %16, %20 : vector<34x128xf32>
    %c1_23 = arith.constant 1 : index
    %c0_24 = arith.constant 0 : index
    %22 = vector.load %arg5[%c1_23, %c0_24] : memref<36x64xbf16, #tpu.memory_space<vmem>>, vector<34x64xbf16>
    %c1_25 = arith.constant 1 : index
    %c0_26 = arith.constant 0 : index
    %c0_27 = arith.constant 0 : index
    %23 = vector.load %arg2[%c1_25, %c0_26, %c0_27] : memref<3x64x128xbf16, #tpu.memory_space<vmem>>, vector<1x64x128xbf16>
    %24 = vector.shape_cast %23 : vector<1x64x128xbf16> to vector<64x128xbf16>
    %cst_28 = arith.constant dense<0.000000e+00> : vector<34x128xf32>
    %25 = tpu.matmul %22, %24, %cst_28 {dimension_numbers = #tpu.dot_dimension_numbers<[1], [0], [0], [1], [0, 0, 1, 1], [], []>} : vector<34x64xbf16>, vector<64x128xbf16>, vector<34x128xf32> -> vector<34x128xf32>
    %26 = arith.addf %21, %25 : vector<34x128xf32>
    %c2 = arith.constant 2 : index
    %c0_29 = arith.constant 0 : index
    %27 = vector.load %arg5[%c2, %c0_29] : memref<36x64xbf16, #tpu.memory_space<vmem>>, vector<34x64xbf16>
    %c2_30 = arith.constant 2 : index
    %c0_31 = arith.constant 0 : index
    %c0_32 = arith.constant 0 : index
    %28 = vector.load %arg2[%c2_30, %c0_31, %c0_32] : memref<3x64x128xbf16, #tpu.memory_space<vmem>>, vector<1x64x128xbf16>
    %29 = vector.shape_cast %28 : vector<1x64x128xbf16> to vector<64x128xbf16>
    %cst_33 = arith.constant dense<0.000000e+00> : vector<34x128xf32>
    %30 = tpu.matmul %27, %29, %cst_33 {dimension_numbers = #tpu.dot_dimension_numbers<[1], [0], [0], [1], [0, 0, 1, 1], [], []>} : vector<34x64xbf16>, vector<64x128xbf16>, vector<34x128xf32> -> vector<34x128xf32>
    %31 = arith.addf %26, %30 : vector<34x128xf32>
    %32 = vector.extract_strided_slice %31 {offsets = [0, 0], sizes = [16, 128], strides = [1, 1]} : vector<34x128xf32> to vector<16x128xf32>
    %c0_34 = arith.constant 0 : index
    %c0_35 = arith.constant 0 : index
    %c0_36 = arith.constant 0 : index
    %33 = vector.load %arg4[%c0_34, %c0_35, %c0_36] : memref<2x16x128xf32, #tpu.memory_space<vmem>>, vector<1x16x128xf32>
    %34 = vector.shape_cast %33 : vector<1x16x128xf32> to vector<16x128xf32>
    %35 = vector.shape_cast %32 : vector<16x128xf32> to vector<1x16x128xf32>
    tpu.vector_store %arg4[%c0_34, %c0_35, %c0_36], %35 {strides = array<i32>} : memref<2x16x128xf32, #tpu.memory_space<vmem>>, vector<1x16x128xf32>,
    %36 = vector.extract_strided_slice %31 {offsets = [18, 0], sizes = [16, 128], strides = [1, 1]} : vector<34x128xf32> to vector<16x128xf32>
    %c1_37 = arith.constant 1 : index
    %c0_38 = arith.constant 0 : index
    %c0_39 = arith.constant 0 : index
    %37 = vector.load %arg4[%c1_37, %c0_38, %c0_39] : memref<2x16x128xf32, #tpu.memory_space<vmem>>, vector<1x16x128xf32>
    %38 = vector.shape_cast %37 : vector<1x16x128xf32> to vector<16x128xf32>
    %39 = vector.shape_cast %36 : vector<16x128xf32> to vector<1x16x128xf32>
    tpu.vector_store %arg4[%c1_37, %c0_38, %c0_39], %39 {strides = array<i32>} : memref<2x16x128xf32, #tpu.memory_space<vmem>>, vector<1x16x128xf32>,
    return
  }
  func.func @transform_0(%arg0: i32) -> (i32, i32, i32) {
    %c0_i32 = arith.constant 0 : i32
    %c0_i32_0 = arith.constant 0 : i32
    %c0_i32_1 = arith.constant 0 : i32
    return %arg0, %c0_i32, %c0_i32_0 : i32, i32, i32
  }
  func.func @transform_1(%arg0: i32) -> (i32, i32, i32) {
    %c0_i32 = arith.constant 0 : i32
    %c0_i32_0 = arith.constant 0 : i32
    %c0_i32_1 = arith.constant 0 : i32
    %c0_i32_2 = arith.constant 0 : i32
    return %c0_i32, %c0_i32_0, %c0_i32_1 : i32, i32, i32
  }
  func.func @transform_2(%arg0: i32) -> (i32, i32) {
    %c0_i32 = arith.constant 0 : i32
    %c0_i32_0 = arith.constant 0 : i32
    %c0_i32_1 = arith.constant 0 : i32
    return %c0_i32, %c0_i32_0 : i32, i32
  }
  func.func @transform_3(%arg0: i32) -> (i32, i32, i32) {
    %c0_i32 = arith.constant 0 : i32
    %c0_i32_0 = arith.constant 0 : i32
    %c0_i32_1 = arith.constant 0 : i32
    return %arg0, %c0_i32, %c0_i32_0 : i32, i32, i32
  }
}

</mosaic_0001>

<llo_original>
// kernel: tpu_custom_call.1
$region0: #{tpu_custom_call.1}
  #allocation0 [shape = 'u32[]', space=smem, size = 0x4, offset = 0x4, fixed_abs, tag = 'smem constant byte address 0x4 - core index']
  #allocation1 [shape = 'u32[144,128]{1,0:T(1,128)}', space=vmem, size = 0x12000, scoped, tag = 'internal scratch']
  #allocation2 [shape = 'bf16[36,64]{1,0:T(8,128)(2,1)}', space=vmem, size = 0x2800, scoped, tag = 'scratch operand']
  %s0 = inlined_call_operand.hbm [shape: bf16[2,16,64], index: 0, kind: input, shape index: {}]
  %s1 = inlined_call_operand.hbm [shape: bf16[3,64,128], index: 1, kind: input, shape index: {}]
  %s2 = inlined_call_operand.vmem [shape: f32[1,128], index: 2, kind: input, shape index: {}]
  %s3 = inlined_call_operand.hbm [shape: f32[2,16,128], index: 3, kind: output, shape index: {}]
  %s4 = sld [smem:[#allocation0]]
  $region30: #{tpu_custom_call.1} parent=0
    _
  %s6 = ssub.s32 1, %s4
  %s7 = scalar_select 0, %s6, %s4
  $region1: #{tpu_custom_call.1} parent=0
    #allocation3 [shape = 'u8[8192]{0}', space=vmem, size = 0x2000, scoped, tag = 'input window, operand 0, single buffered']
    #allocation4 [shape = 's32[1]{0}', space=sflag, size = 0x4, scoped, tag = 'scoped memory for tpu_custom_call.1']
    #allocation5 [shape = 's32[1]{0}', space=sflag, size = 0x4, scoped, tag = 'scoped memory for tpu_custom_call.1']
    #allocation6 [shape = 'u8[49152]{0}', space=vmem, size = 0xc000, scoped, tag = 'input window, operand 1, single buffered']
    #allocation7 [shape = 's32[1]{0}', space=sflag, size = 0x4, scoped, tag = 'scoped memory for tpu_custom_call.1']
    #allocation8 [shape = 'u8[16384]{0}', space=vmem, size = 0x4000, scoped, tag = 'output window, operand 0, single buffered']
    %8 = vsyncpa [#allocation4], 0
    %9 = vsyncpa [#allocation7], 0
    %10 = vsyncpa [#allocation5], 0
    // Predicated region
    $region2: #{tpu_custom_call.1} parent=1 // pred_check
      _
    $region3: #{tpu_custom_call.1} parent=1 // pred_check_branch
      %12 = sbr.rel (0) target = $region5
    $region4: #{tpu_custom_call.1} parent=1 // pred_region
      %s14 = ssub.s32 256, 256
      %15 = vsyncadd [#allocation4], %s14
      %s16 = sshll.u32 [#allocation3], 4
      %s17 = int_to_ptr.vmem [resolvable:$true] %s16
      %22 = dma.hbm_to_vmem [thread:$0]  %s0, 256, %s17, [#allocation4], 64, 64, 4
    $region5: #{tpu_custom_call.1} parent=1 // pred_fallthru
      _
    // Predicated region
    $region6: #{tpu_custom_call.1} parent=1 // pred_check
      _
    $region7: #{tpu_custom_call.1} parent=1 // pred_check_branch
      %24 = sbr.rel (0) target = $region9
    $region8: #{tpu_custom_call.1} parent=1 // pred_region
      %s26 = ssub.s32 1536, 1536
      %27 = vsyncadd [#allocation7], %s26
      %s28 = sshll.u32 [#allocation6], 4
      %s29 = int_to_ptr.vmem [resolvable:$true] %s28
      %34 = dma.hbm_to_vmem [thread:$0]  %s1, 1536, %s29, [#allocation7], 64, 64, 4
    $region9: #{tpu_custom_call.1} parent=1 // pred_fallthru
      _
    // Predicated region
    $region10: #{tpu_custom_call.1} parent=1 // pred_check
      _
    $region11: #{tpu_custom_call.1} parent=1 // pred_check_branch
      %36 = sbr.rel (0) target = $region13
    $region12: #{tpu_custom_call.1} parent=1 // pred_region
      _
    $region13: #{tpu_custom_call.1} parent=1 // pred_fallthru
      _
    // Predicated region
    $region14: #{tpu_custom_call.1} parent=1 // pred_check
      _
    $region15: #{tpu_custom_call.1} parent=1 // pred_check_branch
      %38 = sbr.rel (0) target = $region17
    $region16: #{tpu_custom_call.1} parent=1 // pred_region
      %39 = dma.done [#allocation4], 256
    $region17: #{tpu_custom_call.1} parent=1 // pred_fallthru
      _
    // Predicated region
    $region18: #{tpu_custom_call.1} parent=1 // pred_check
      _
    $region19: #{tpu_custom_call.1} parent=1 // pred_check_branch
      %41 = sbr.rel (0) target = $region21
    $region20: #{tpu_custom_call.1} parent=1 // pred_region
      %42 = dma.done [#allocation7], 1536
    $region21: #{tpu_custom_call.1} parent=1 // pred_fallthru
      _
    %vm44 = vcmask 516096
    %vm45 = vsmask.f32 256
    %vm46 = vmand %vm44, %vm45
    %v47 = vld [vmem:[#allocation2] sm:$0x1]
    %v48 = vsel %vm46, 0, %v47
    %49 = vst [vmem:[#allocation2] sm:$0x1] %v48
    %vm50 = vsmask.f32 7938
    %vm51 = vmand %vm44, %vm50
    %v52 = vld [vmem:[#allocation2 + $0x8] sm:$0x1]
    %v53 = vsel %vm51, 0, %v52
    %54 = vst [vmem:[#allocation2 + $0x8] sm:$0x1] %v53
    %v55 = vld [vmem:[#allocation3] sm:$0xf]
    %v56 = vld [vmem:[#allocation3 + $0x4] sm:$0xf]
    %vm57 = vsmask.f32 4368
    %vm58 = vmor %vm45, %vm57
    %v60 = vshrl.u32 %v55, 16
    %v62 = vrot.slane %v60, 7
    %v63 = vshll.u32 %v55, 16
    %v65 = vor.u32 %v62, %v63
    %v66 = vrot.slane %v62, 4
    %v68 = vshrl.u32 %v56, 16
    %v70 = vrot.slane %v68, 7
    %v71 = vshll.u32 %v56, 16
    %v73 = vor.u32 %v70, %v71
    %v74 = vsel %vm58, %v66, %v73
    %v75 = vrot.slane %v70, 4
    %vm79 = vcmask 519168
    %vm80 = vmand %vm79, %vm50
    %v81 = vld [vmem:[#allocation2] sm:$0xf]
    %v82 = vsel %vm80, %v65, %v81
    %83 = vst [vmem:[#allocation2] sm:$0xf] %v82
    %vm84 = vcmask 519168
    %85 = vst.msk [vmem:[#allocation2 + $0x4] sm:$0xf] %vm84, %v74
    %v86 = vld [vmem:[#allocation2 + $0x8] sm:$0x1]
    %v87 = vsel %vm46, %v75, %v86
    %88 = vst [vmem:[#allocation2 + $0x8] sm:$0x1] %v87
    %vm89 = vcmask 517121
    %vm90 = vsmask.f32 1280
    %vm91 = vmand %vm89, %vm90
    %v92 = vld [vmem:[#allocation2 + $0x8] sm:$0x2]
    %v93 = vsel %vm91, 0, %v92
    %94 = vst [vmem:[#allocation2 + $0x8] sm:$0x2] %v93
    %vm95 = vsmask.f32 7942
    %vm96 = vmand %vm89, %vm95
    %v97 = vld [vmem:[#allocation2 + $0x10] sm:$0x2]
    %v98 = vsel %vm96, 0, %v97
    %99 = vst [vmem:[#allocation2 + $0x10] sm:$0x2] %v98
    %s100 = scalar_lea.vmem [#allocation3], 8
    %v101 = vld [vmem:[%s100] sm:$0xf]
    %v102 = vld [vmem:[%s100 + $0x4] sm:$0xf]
    %vm103 = vsmask.f32 5392
    %vm104 = vmor %vm90, %vm103
    %v106 = vshrl.u32 %v101, 16
    %v108 = vrot.slane %v106, 6
    %v109 = vshll.u32 %v101, 16
    %v111 = vrot.slane %v109, 7
    %v112 = vor.u32 %v108, %v111
    %v113 = vrot.slane %v112, 4
    %v115 = vshrl.u32 %v102, 16
    %v117 = vrot.slane %v115, 6
    %v118 = vshll.u32 %v102, 16
    %v120 = vrot.slane %v118, 7
    %v121 = vor.u32 %v117, %v120
    %v122 = vsel %vm104, %v113, %v121
    %v123 = vrot.slane %v121, 4
    %vm127 = vcmask 519169
    %vm128 = vmand %vm127, %vm95
    %v129 = vld [vmem:[#allocation2 + $0x8] sm:$0xe]
    %v130 = vsel %vm128, %v112, %v129
    %131 = vst [vmem:[#allocation2 + $0x8] sm:$0xe] %v130
    %132 = vst.msk [vmem:[#allocation2 + $0xc] sm:$0xf] %vm84, %v122
    %vm133 = vcmask 517120
    %vm134 = vmand %vm133, %vm90
    %v135 = vld [vmem:[#allocation2 + $0x10] sm:$0x3]
    %v136 = vsel %vm134, %v123, %v135
    %137 = vst [vmem:[#allocation2 + $0x10] sm:$0x3] %v136
    %v138 = vld [vmem:[%s2] sm:$0x1]
    %v140 = vlaneseq
    %v141 = vshrl.u32 %v140, 7
    %v142 = vsub.s32 0, %v141
    %v143 = vrot.slane %v138, %v142
    %v145 = vld [vmem:[#allocation2] sm:$0xf]
    %v146 = vld [vmem:[#allocation2 + $0x4] sm:$0xf]
    %v147 = vld [vmem:[#allocation2 + $0x8] sm:$0xf]
    %v148 = vld [vmem:[#allocation2 + $0xc] sm:$0xf]
    %v149 = vld [vmem:[#allocation2 + $0x10] sm:$0x1]
    %v150 = vld [vmem:[#allocation6] sm:$0xf]
    %v151 = vld [vmem:[#allocation6 + $0x4] sm:$0xf]
    %v152 = vld [vmem:[#allocation6 + $0x8] sm:$0xf]
    %v153 = vld [vmem:[#allocation6 + $0xc] sm:$0xf]
    %v154 = vld [vmem:[#allocation6 + $0x10] sm:$0xf]
    %v155 = vld [vmem:[#allocation6 + $0x14] sm:$0xf]
    %v156 = vld [vmem:[#allocation6 + $0x18] sm:$0xf]
    %v157 = vld [vmem:[#allocation6 + $0x1c] sm:$0xf]
    %v163 = vunpack.c.l.b16 %v145
    %v164 = vunpack.c.l.b16 %v146
    %v165 = vunpack.c.l.b16 %v147
    %v166 = vunpack.c.l.b16 %v148
    %v167 = vunpack.c.l.b16 %v149
    %v168 = vpack.c.b16 %v164, %v163
    %v169 = vpack.c.b16 %v166, %v165
    %v170 = vpack.c.b16 %v167, %v167
    %v179 = vunpack.c.l.b16 %v150
    %v180 = vunpack.c.l.b16 %v151
    %v181 = vunpack.c.l.b16 %v152
    %v182 = vunpack.c.l.b16 %v153
    %v183 = vunpack.c.l.b16 %v154
    %v184 = vunpack.c.l.b16 %v155
    %v185 = vunpack.c.l.b16 %v156
    %v186 = vunpack.c.l.b16 %v157
    %v187 = vpack.c.b16 %v180, %v179
    %v188 = vpack.c.b16 %v182, %v181
    %v189 = vpack.c.b16 %v184, %v183
    %v190 = vpack.c.b16 %v186, %v185
    %vm195 = vcmask 523264
    %v197 = vsel %vm195, %v168, 0
    %v200 = vsel %vm195, %v169, 0
    %v203 = vsel %vm195, %v170, 0
    %205 = vmatprep.subr.bf16.mxu0 0
    %206 = vmatpush1.bf16.msra.mxu0 %v187
    %207 = vmatprep.subr.bf16.mxu0 0
    %208 = vmatpush1.bf16.msra.mxu0 %v188
    %209 = vmatprep.subr.bf16.mxu0 0
    %210 = vmatpush1.bf16.msra.mxu0 %v189
    %211 = vmatprep.subr.bf16.mxu0 0
    %212 = vmatpush1.bf16.msra.mxu0 %v190
    %213 = vmatprep.subr.bf16.mxu0 0
    %214 = vmatpush1.bf16.msra.mxu0 0
    %215 = vmatprep.subr.bf16.mxu0 0
    %216 = vmatpush1.bf16.msra.mxu0 0
    %217 = vmatprep.subr.bf16.mxu0 0
    %218 = vmatpush1.bf16.msra.mxu0 0
    %219 = vmatprep.subr.bf16.mxu0 0
    %220 = vmatpush1.bf16.msra.mxu0 0
    %221 = vmatprep.subr.bf16.mxu0 0
    %222 = vmatpush1.bf16.msra.mxu0 0
    %223 = vmatprep.subr.bf16.mxu0 0
    %224 = vmatpush1.bf16.msra.mxu0 0
    %225 = vmatprep.subr.bf16.mxu0 0
    %226 = vmatpush1.bf16.msra.mxu0 0
    %227 = vmatprep.subr.bf16.mxu0 0
    %228 = vmatpush1.bf16.msra.mxu0 0
    %229 = vmatprep.subr.bf16.mxu0 0
    %230 = vmatpush1.bf16.msra.mxu0 0
    %231 = vmatprep.subr.bf16.mxu0 0
    %232 = vmatpush1.bf16.msra.mxu0 0
    %233 = vmatprep.subr.bf16.mxu0 0
    %234 = vmatpush1.bf16.msra.mxu0 0
    %235 = vmatprep.subr.bf16.mxu0 0
    %236 = vmatpush1.bf16.msra.mxu0 0
    %237 = vmatprep.mubr.bf16.mxu0 0
    %238 = vmatmul.mubr.bf16.gmra.mrb[0].mxu0 %v197
    %v239 = vpop.f32.mrb[0].mxu0
    %v240 = vadd.f32 0.0, %v239
    %v241 = vpop.f32.mrb[0].mxu0
    %v242 = vpop.f32.mrb[0].mxu0
    %v243 = vadd.f32 0.0, %v242
    %v244 = vpop.f32.mrb[0].mxu0
    %245 = vmatprep.mubr.bf16.mxu0 0
    %246 = vmatmul.mubr.bf16.gmra.mrb[0].mxu0 %v200
    %v247 = vpop.f32.mrb[0].mxu0
    %v248 = vadd.f32 0.0, %v247
    %v249 = vpop.f32.mrb[0].mxu0
    %v250 = vpop.f32.mrb[0].mxu0
    %v251 = vadd.f32 0.0, %v250
    %v252 = vpop.f32.mrb[0].mxu0
    %253 = vmatprep.mubr.bf16.mxu0 0
    %254 = vmatmul.mubr.bf16.gmra.mrb[0].mxu0 %v203
    %v255 = vpop.f32.mrb[0].mxu0
    %v256 = vadd.f32 0.0, %v255
    %v257 = vpop.f32.mrb[0].mxu0
    %v258 = vpop.f32.mrb[0].mxu0
    %v259 = vpop.f32.mrb[0].mxu0
    %260 = vdwg.mxu0
    %v261 = vadd.f32 %v143, %v240
    %v262 = vadd.f32 %v143, %v243
    %v263 = vadd.f32 %v143, %v248
    %v264 = vadd.f32 %v143, %v251
    %v265 = vadd.f32 %v143, %v256
    %v266 = vld [vmem:[#allocation2 + $0x10] sm:$0x3]
    %s267 = scalar_lea.vmem [#allocation6], 32
    %v268 = vld [vmem:[%s267] sm:$0xf]
    %v269 = vld [vmem:[%s267 + $0x4] sm:$0xf]
    %v270 = vld [vmem:[%s267 + $0x8] sm:$0xf]
    %v271 = vld [vmem:[%s267 + $0xc] sm:$0xf]
    %v272 = vld [vmem:[%s267 + $0x10] sm:$0xf]
    %v273 = vld [vmem:[%s267 + $0x14] sm:$0xf]
    %v274 = vld [vmem:[%s267 + $0x18] sm:$0xf]
    %v275 = vld [vmem:[%s267 + $0x1c] sm:$0xf]
    %v277 = vunpack.c.l.b16 %v266
    %v278 = vpack.c.b16 %v277, %v277
    %vm279 = vsmask.f32 7424
    %v280 = vshrl.u32 %v168, 16
    %v282 = vshll.u32 %v168, 16
    %v284 = vrot.slane %v282, 1
    %v285 = vor.u32 %v280, %v284
    %v286 = vshll.u32 %v169, 16
    %v288 = vrot.slane %v286, 1
    %v289 = vsel %vm279, %v285, %v288
    %v290 = vshrl.u32 %v169, 16
    %v292 = vor.u32 %v290, %v288
    %v294 = vshll.u32 %v278, 16
    %v296 = vrot.slane %v294, 1
    %v297 = vsel %vm279, %v292, %v296
    %v298 = vshrl.u32 %v278, 16
    %v300 = vor.u32 %v298, %v296
    %v309 = vunpack.c.l.b16 %v268
    %v310 = vunpack.c.l.b16 %v269
    %v311 = vunpack.c.l.b16 %v270
    %v312 = vunpack.c.l.b16 %v271
    %v313 = vunpack.c.l.b16 %v272
    %v314 = vunpack.c.l.b16 %v273
    %v315 = vunpack.c.l.b16 %v274
    %v316 = vunpack.c.l.b16 %v275
    %v317 = vpack.c.b16 %v310, %v309
    %v318 = vpack.c.b16 %v312, %v311
    %v319 = vpack.c.b16 %v314, %v313
    %v320 = vpack.c.b16 %v316, %v315
    %v326 = vsel %vm195, %v289, 0
    %v329 = vsel %vm195, %v297, 0
    %v332 = vsel %vm195, %v300, 0
    %334 = vmatprep.subr.bf16.mxu0 0
    %335 = vmatpush1.bf16.msra.mxu0 %v317
    %336 = vmatprep.subr.bf16.mxu0 0
    %337 = vmatpush1.bf16.msra.mxu0 %v318
    %338 = vmatprep.subr.bf16.mxu0 0
    %339 = vmatpush1.bf16.msra.mxu0 %v319
    %340 = vmatprep.subr.bf16.mxu0 0
    %341 = vmatpush1.bf16.msra.mxu0 %v320
    %342 = vmatprep.subr.bf16.mxu0 0
    %343 = vmatpush1.bf16.msra.mxu0 0
    %344 = vmatprep.subr.bf16.mxu0 0
    %345 = vmatpush1.bf16.msra.mxu0 0
    %346 = vmatprep.subr.bf16.mxu0 0
    %347 = vmatpush1.bf16.msra.mxu0 0
    %348 = vmatprep.subr.bf16.mxu0 0
    %349 = vmatpush1.bf16.msra.mxu0 0
    %350 = vmatprep.subr.bf16.mxu0 0
    %351 = vmatpush1.bf16.msra.mxu0 0
    %352 = vmatprep.subr.bf16.mxu0 0
    %353 = vmatpush1.bf16.msra.mxu0 0
    %354 = vmatprep.subr.bf16.mxu0 0
    %355 = vmatpush1.bf16.msra.mxu0 0
    %356 = vmatprep.subr.bf16.mxu0 0
    %357 = vmatpush1.bf16.msra.mxu0 0
    %358 = vmatprep.subr.bf16.mxu0 0
    %359 = vmatpush1.bf16.msra.mxu0 0
    %360 = vmatprep.subr.bf16.mxu0 0
    %361 = vmatpush1.bf16.msra.mxu0 0
    %362 = vmatprep.subr.bf16.mxu0 0
    %363 = vmatpush1.bf16.msra.mxu0 0
    %364 = vmatprep.subr.bf16.mxu0 0
    %365 = vmatpush1.bf16.msra.mxu0 0
    %366 = vmatprep.mubr.bf16.mxu0 0
    %367 = vmatmul.mubr.bf16.gmra.mrb[0].mxu0 %v326
    %v368 = vpop.f32.mrb[0].mxu0
    %v369 = vadd.f32 0.0, %v368
    %v370 = vpop.f32.mrb[0].mxu0
    %v371 = vpop.f32.mrb[0].mxu0
    %v372 = vadd.f32 0.0, %v371
    %v373 = vpop.f32.mrb[0].mxu0
    %374 = vmatprep.mubr.bf16.mxu0 0
    %375 = vmatmul.mubr.bf16.gmra.mrb[0].mxu0 %v329
    %v376 = vpop.f32.mrb[0].mxu0
    %v377 = vadd.f32 0.0, %v376
    %v378 = vpop.f32.mrb[0].mxu0
    %v379 = vpop.f32.mrb[0].mxu0
    %v380 = vadd.f32 0.0, %v379
    %v381 = vpop.f32.mrb[0].mxu0
    %382 = vmatprep.mubr.bf16.mxu0 0
    %383 = vmatmul.mubr.bf16.gmra.mrb[0].mxu0 %v332
    %v384 = vpop.f32.mrb[0].mxu0
    %v385 = vadd.f32 0.0, %v384
    %v386 = vpop.f32.mrb[0].mxu0
    %v387 = vpop.f32.mrb[0].mxu0
    %v388 = vpop.f32.mrb[0].mxu0
    %389 = vdwg.mxu0
    %v390 = vadd.f32 %v261, %v369
    %v391 = vadd.f32 %v262, %v372
    %v392 = vadd.f32 %v263, %v377
    %v393 = vadd.f32 %v264, %v380
    %v394 = vadd.f32 %v265, %v385
    %v395 = vld [vmem:[#allocation2] sm:$0xe]
    %s396 = scalar_lea.vmem [#allocation6], 64
    %v397 = vld [vmem:[%s396] sm:$0xf]
    %v398 = vld [vmem:[%s396 + $0x4] sm:$0xf]
    %v399 = vld [vmem:[%s396 + $0x8] sm:$0xf]
    %v400 = vld [vmem:[%s396 + $0xc] sm:$0xf]
    %v401 = vld [vmem:[%s396 + $0x10] sm:$0xf]
    %v402 = vld [vmem:[%s396 + $0x14] sm:$0xf]
    %v403 = vld [vmem:[%s396 + $0x18] sm:$0xf]
    %v404 = vld [vmem:[%s396 + $0x1c] sm:$0xf]
    %v406 = vunpack.c.l.b16 %v395
    %v407 = vpack.c.b16 %v164, %v406
    %vm408 = vcmask 1046528
    %v409 = vrot.slane %v407, 1
    %v410 = vrot.slane %v169, 1
    %v411 = vsel %vm408, %v409, %v410
    %v412 = vrot.slane %v278, 1
    %v413 = vsel %vm408, %v410, %v412
    %v422 = vunpack.c.l.b16 %v397
    %v423 = vunpack.c.l.b16 %v398
    %v424 = vunpack.c.l.b16 %v399
    %v425 = vunpack.c.l.b16 %v400
    %v426 = vunpack.c.l.b16 %v401
    %v427 = vunpack.c.l.b16 %v402
    %v428 = vunpack.c.l.b16 %v403
    %v429 = vunpack.c.l.b16 %v404
    %v430 = vpack.c.b16 %v423, %v422
    %v431 = vpack.c.b16 %v425, %v424
    %v432 = vpack.c.b16 %v427, %v426
    %v433 = vpack.c.b16 %v429, %v428
    %v439 = vsel %vm195, %v411, 0
    %v442 = vsel %vm195, %v413, 0
    %v445 = vsel %vm195, %v412, 0
    %447 = vmatprep.subr.bf16.mxu0 0
    %448 = vmatpush1.bf16.msra.mxu0 %v430
    %449 = vmatprep.subr.bf16.mxu0 0
    %450 = vmatpush1.bf16.msra.mxu0 %v431
    %451 = vmatprep.subr.bf16.mxu0 0
    %452 = vmatpush1.bf16.msra.mxu0 %v432
    %453 = vmatprep.subr.bf16.mxu0 0
    %454 = vmatpush1.bf16.msra.mxu0 %v433
    %455 = vmatprep.subr.bf16.mxu0 0
    %456 = vmatpush1.bf16.msra.mxu0 0
    %457 = vmatprep.subr.bf16.mxu0 0
    %458 = vmatpush1.bf16.msra.mxu0 0
    %459 = vmatprep.subr.bf16.mxu0 0
    %460 = vmatpush1.bf16.msra.mxu0 0
    %461 = vmatprep.subr.bf16.mxu0 0
    %462 = vmatpush1.bf16.msra.mxu0 0
    %463 = vmatprep.subr.bf16.mxu0 0
    %464 = vmatpush1.bf16.msra.mxu0 0
    %465 = vmatprep.subr.bf16.mxu0 0
    %466 = vmatpush1.bf16.msra.mxu0 0
    %467 = vmatprep.subr.bf16.mxu0 0
    %468 = vmatpush1.bf16.msra.mxu0 0
    %469 = vmatprep.subr.bf16.mxu0 0
    %470 = vmatpush1.bf16.msra.mxu0 0
    %471 = vmatprep.subr.bf16.mxu0 0
    %472 = vmatpush1.bf16.msra.mxu0 0
    %473 = vmatprep.subr.bf16.mxu0 0
    %474 = vmatpush1.bf16.msra.mxu0 0
    %475 = vmatprep.subr.bf16.mxu0 0
    %476 = vmatpush1.bf16.msra.mxu0 0
    %477 = vmatprep.subr.bf16.mxu0 0
    %478 = vmatpush1.bf16.msra.mxu0 0
    %479 = vmatprep.mubr.bf16.mxu0 0
    %480 = vmatmul.mubr.bf16.gmra.mrb[0].mxu0 %v439
    %v481 = vpop.f32.mrb[0].mxu0
    %v482 = vadd.f32 0.0, %v481
    %v483 = vpop.f32.mrb[0].mxu0
    %v484 = vpop.f32.mrb[0].mxu0
    %v485 = vadd.f32 0.0, %v484
    %v486 = vpop.f32.mrb[0].mxu0
    %487 = vmatprep.mubr.bf16.mxu0 0
    %488 = vmatmul.mubr.bf16.gmra.mrb[0].mxu0 %v442
    %v489 = vpop.f32.mrb[0].mxu0
    %v490 = vadd.f32 0.0, %v489
    %v491 = vpop.f32.mrb[0].mxu0
    %v492 = vpop.f32.mrb[0].mxu0
    %v493 = vadd.f32 0.0, %v492
    %v494 = vpop.f32.mrb[0].mxu0
    %495 = vmatprep.mubr.bf16.mxu0 0
    %496 = vmatmul.mubr.bf16.gmra.mrb[0].mxu0 %v445
    %v497 = vpop.f32.mrb[0].mxu0
    %v498 = vadd.f32 0.0, %v497
    %v499 = vpop.f32.mrb[0].mxu0
    %v500 = vpop.f32.mrb[0].mxu0
    %v501 = vpop.f32.mrb[0].mxu0
    %502 = vdwg.mxu0
    %v503 = vadd.f32 %v390, %v482
    %v504 = vadd.f32 %v391, %v485
    %v505 = vadd.f32 %v392, %v490
    %v506 = vadd.f32 %v393, %v493
    %v507 = vadd.f32 %v394, %v498
    %508 = vst [vmem:[#allocation8] sm:$0xff] %v503
    %509 = vst [vmem:[#allocation8 + $0x8] sm:$0xff] %v504
    %s510 = scalar_lea.vmem [#allocation8], 16
    %511 = vst [vmem:[%s510 - $0x2] sm:$0xfc] %v505
    %512 = vst [vmem:[%s510 + $0x6] sm:$0xff] %v506
    %513 = vst [vmem:[%s510 + $0xe] sm:$0x3] %v507
    // Predicated region
    $region22: #{tpu_custom_call.1} parent=1 // pred_check
      _
    $region23: #{tpu_custom_call.1} parent=1 // pred_check_branch
      %515 = sbr.rel (0) target = $region25
    $region24: #{tpu_custom_call.1} parent=1 // pred_region
      %s517 = ssub.s32 512, 512
      %518 = vsyncadd [#allocation5], %s517
      %s519 = sshll.u32 [#allocation8], 4
      %s520 = int_to_ptr.vmem [resolvable:$true] %s519
      %525 = dma.vmem_to_hbm [thread:$0]  %s520, 512, %s3, [#allocation5], 128, 128, 8
    $region25: #{tpu_custom_call.1} parent=1 // pred_fallthru
      _
    // Predicated region
    $region26: #{tpu_custom_call.1} parent=1 // pred_check
      _
    $region27: #{tpu_custom_call.1} parent=1 // pred_check_branch
      %527 = sbr.rel (0) target = $region29
    $region28: #{tpu_custom_call.1} parent=1 // pred_region
      %528 = dma.done [#allocation5], 512
    $region29: #{tpu_custom_call.1} parent=1 // pred_fallthru
      _
    %529 = vsyncpa [#allocation4], 1
    %530 = vsyncpa [#allocation7], 1
    %531 = vsyncpa [#allocation5], 1

// kernel: tpu_custom_call.1
$region0: #{tpu_custom_call.1}
  #allocation0 [shape = 'u32[]', space=smem, size = 0x4, offset = 0x4, fixed_abs, tag = 'smem constant byte address 0x4 - core index']
  #allocation1 [shape = 'u32[144,128]{1,0:T(1,128)}', space=vmem, size = 0x12000, scoped, tag = 'internal scratch']
  #allocation2 [shape = 'bf16[36,64]{1,0:T(8,128)(2,1)}', space=vmem, size = 0x2800, scoped, tag = 'scratch operand']
  %s0 = inlined_call_operand.hbm [shape: bf16[2,16,64], index: 0, kind: input, shape index: {}]
  %s1 = inlined_call_operand.hbm [shape: bf16[3,64,128], index: 1, kind: input, shape index: {}]
  %s2 = inlined_call_operand.vmem [shape: f32[1,128], index: 2, kind: input, shape index: {}]
  %s3 = inlined_call_operand.hbm [shape: f32[2,16,128], index: 3, kind: output, shape index: {}]
  %s4 = sld [smem:[#allocation0]]
  $region30: #{tpu_custom_call.1} parent=0
    _
  %s6 = ssub.s32 1, %s4
  %s7 = scalar_select 0, %s6, %s4
  $region1: #{tpu_custom_call.1} parent=0
    #allocation3 [shape = 'u8[8192]{0}', space=vmem, size = 0x2000, scoped, tag = 'input window, operand 0, single buffered']
    #allocation4 [shape = 's32[1]{0}', space=sflag, size = 0x4, scoped, tag = 'scoped memory for tpu_custom_call.1']
    #allocation5 [shape = 's32[1]{0}', space=sflag, size = 0x4, scoped, tag = 'scoped memory for tpu_custom_call.1']
    #allocation6 [shape = 'u8[49152]{0}', space=vmem, size = 0xc000, scoped, tag = 'input window, operand 1, single buffered']
    #allocation7 [shape = 's32[1]{0}', space=sflag, size = 0x4, scoped, tag = 'scoped memory for tpu_custom_call.1']
    #allocation8 [shape = 'u8[16384]{0}', space=vmem, size = 0x4000, scoped, tag = 'output window, operand 0, single buffered']
    %8 = vsyncpa [#allocation4], 0
    %9 = vsyncpa [#allocation7], 0
    %10 = vsyncpa [#allocation5], 0
    // Predicated region
    $region2: #{tpu_custom_call.1} parent=1 // pred_check
      _
    $region3: #{tpu_custom_call.1} parent=1 // pred_check_branch
      %12 = sbr.rel (0) target = $region5
    $region4: #{tpu_custom_call.1} parent=1 // pred_region
      %s14 = ssub.s32 256, 256
      %15 = vsyncadd [#allocation4], %s14
      %s16 = sshll.u32 [#allocation3], 4
      %s17 = int_to_ptr.vmem [resolvable:$true] %s16
      %22 = dma.hbm_to_vmem [thread:$0]  %s0, 256, %s17, [#allocation4], 64, 64, 4
    $region5: #{tpu_custom_call.1} parent=1 // pred_fallthru
      _
    // Predicated region
    $region6: #{tpu_custom_call.1} parent=1 // pred_check
      _
    $region7: #{tpu_custom_call.1} parent=1 // pred_check_branch
      %24 = sbr.rel (0) target = $region9
    $region8: #{tpu_custom_call.1} parent=1 // pred_region
      %s26 = ssub.s32 1536, 1536
      %27 = vsyncadd [#allocation7], %s26
      %s28 = sshll.u32 [#allocation6], 4
      %s29 = int_to_ptr.vmem [resolvable:$true] %s28
      %34 = dma.hbm_to_vmem [thread:$0]  %s1, 1536, %s29, [#allocation7], 64, 64, 4
    $region9: #{tpu_custom_call.1} parent=1 // pred_fallthru
      _
    // Predicated region
    $region10: #{tpu_custom_call.1} parent=1 // pred_check
      _
    $region11: #{tpu_custom_call.1} parent=1 // pred_check_branch
      %36 = sbr.rel (0) target = $region13
    $region12: #{tpu_custom_call.1} parent=1 // pred_region
      _
    $region13: #{tpu_custom_call.1} parent=1 // pred_fallthru
      _
    // Predicated region
    $region14: #{tpu_custom_call.1} parent=1 // pred_check
      _
    $region15: #{tpu_custom_call.1} parent=1 // pred_check_branch
      %38 = sbr.rel (0) target = $region17
    $region16: #{tpu_custom_call.1} parent=1 // pred_region
      %39 = dma.done [#allocation4], 256
    $region17: #{tpu_custom_call.1} parent=1 // pred_fallthru
      _
    // Predicated region
    $region18: #{tpu_custom_call.1} parent=1 // pred_check
      _
    $region19: #{tpu_custom_call.1} parent=1 // pred_check_branch
      %41 = sbr.rel (0) target = $region21
    $region20: #{tpu_custom_call.1} parent=1 // pred_region
      %42 = dma.done [#allocation7], 1536
    $region21: #{tpu_custom_call.1} parent=1 // pred_fallthru
      _
    %vm44 = vcmask 516096
    %vm45 = vsmask.f32 256
    %vm46 = vmand %vm44, %vm45
    %v47 = vld [vmem:[#allocation2] sm:$0x1]
    %v48 = vsel %vm46, 0, %v47
    %49 = vst [vmem:[#allocation2] sm:$0x1] %v48
    %vm50 = vsmask.f32 7938
    %vm51 = vmand %vm44, %vm50
    %v52 = vld [vmem:[#allocation2 + $0x8] sm:$0x1]
    %v53 = vsel %vm51, 0, %v52
    %54 = vst [vmem:[#allocation2 + $0x8] sm:$0x1] %v53
    %v55 = vld [vmem:[#allocation3] sm:$0xf]
    %v56 = vld [vmem:[#allocation3 + $0x4] sm:$0xf]
    %vm57 = vsmask.f32 4368
    %vm58 = vmor %vm45, %vm57
    %v60 = vshrl.u32 %v55, 16
    %v62 = vrot.slane %v60, 7
    %v63 = vshll.u32 %v55, 16
    %v65 = vor.u32 %v62, %v63
    %v66 = vrot.slane %v62, 4
    %v68 = vshrl.u32 %v56, 16
    %v70 = vrot.slane %v68, 7
    %v71 = vshll.u32 %v56, 16
    %v73 = vor.u32 %v70, %v71
    %v74 = vsel %vm58, %v66, %v73
    %v75 = vrot.slane %v70, 4
    %vm79 = vcmask 519168
    %vm80 = vmand %vm79, %vm50
    %v81 = vld [vmem:[#allocation2] sm:$0xf]
    %v82 = vsel %vm80, %v65, %v81
    %83 = vst [vmem:[#allocation2] sm:$0xf] %v82
    %vm84 = vcmask 519168
    %85 = vst.msk [vmem:[#allocation2 + $0x4] sm:$0xf] %vm84, %v74
    %v86 = vld [vmem:[#allocation2 + $0x8] sm:$0x1]
    %v87 = vsel %vm46, %v75, %v86
    %88 = vst [vmem:[#allocation2 + $0x8] sm:$0x1] %v87
    %vm89 = vcmask 517121
    %vm90 = vsmask.f32 1280
    %vm91 = vmand %vm89, %vm90
    %v92 = vld [vmem:[#allocation2 + $0x8] sm:$0x2]
    %v93 = vsel %vm91, 0, %v92
    %94 = vst [vmem:[#allocation2 + $0x8] sm:$0x2] %v93
    %vm95 = vsmask.f32 7942
    %vm96 = vmand %vm89, %vm95
    %v97 = vld [vmem:[#allocation2 + $0x10] sm:$0x2]
    %v98 = vsel %vm96, 0, %v97
    %99 = vst [vmem:[#allocation2 + $0x10] sm:$0x2] %v98
    %s100 = scalar_lea.vmem [#allocation3], 8
    %v101 = vld [vmem:[%s100] sm:$0xf]
    %v102 = vld [vmem:[%s100 + $0x4] sm:$0xf]
    %vm103 = vsmask.f32 5392
    %vm104 = vmor %vm90, %vm103
    %v106 = vshrl.u32 %v101, 16
    %v108 = vrot.slane %v106, 6
    %v109 = vshll.u32 %v101, 16
    %v111 = vrot.slane %v109, 7
    %v112 = vor.u32 %v108, %v111
    %v113 = vrot.slane %v112, 4
    %v115 = vshrl.u32 %v102, 16
    %v117 = vrot.slane %v115, 6
    %v118 = vshll.u32 %v102, 16
    %v120 = vrot.slane %v118, 7
    %v121 = vor.u32 %v117, %v120
    %v122 = vsel %vm104, %v113, %v121
    %v123 = vrot.slane %v121, 4
    %vm127 = vcmask 519169
    %vm128 = vmand %vm127, %vm95
    %v129 = vld [vmem:[#allocation2 + $0x8] sm:$0xe]
    %v130 = vsel %vm128, %v112, %v129
    %131 = vst [vmem:[#allocation2 + $0x8] sm:$0xe] %v130
    %132 = vst.msk [vmem:[#allocation2 + $0xc] sm:$0xf] %vm84, %v122
    %vm133 = vcmask 517120
    %vm134 = vmand %vm133, %vm90
    %v135 = vld [vmem:[#allocation2 + $0x10] sm:$0x3]
    %v136 = vsel %vm134, %v123, %v135
    %137 = vst [vmem:[#allocation2 + $0x10] sm:$0x3] %v136
    %v138 = vld [vmem:[%s2] sm:$0x1]
    %v140 = vlaneseq
    %v141 = vshrl.u32 %v140, 7
    %v142 = vsub.s32 0, %v141
    %v143 = vrot.slane %v138, %v142
    %v145 = vld [vmem:[#allocation2] sm:$0xf]
    %v146 = vld [vmem:[#allocation2 + $0x4] sm:$0xf]
    %v147 = vld [vmem:[#allocation2 + $0x8] sm:$0xf]
    %v148 = vld [vmem:[#allocation2 + $0xc] sm:$0xf]
    %v149 = vld [vmem:[#allocation2 + $0x10] sm:$0x1]
    %v150 = vld [vmem:[#allocation6] sm:$0xf]
    %v151 = vld [vmem:[#allocation6 + $0x4] sm:$0xf]
    %v152 = vld [vmem:[#allocation6 + $0x8] sm:$0xf]
    %v153 = vld [vmem:[#allocation6 + $0xc] sm:$0xf]
    %v154 = vld [vmem:[#allocation6 + $0x10] sm:$0xf]
    %v155 = vld [vmem:[#allocation6 + $0x14] sm:$0xf]
    %v156 = vld [vmem:[#allocation6 + $0x18] sm:$0xf]
    %v157 = vld [vmem:[#allocation6 + $0x1c] sm:$0xf]
    %v163 = vunpack.c.l.b16 %v145
    %v164 = vunpack.c.l.b16 %v146
    %v165 = vunpack.c.l.b16 %v147
    %v166 = vunpack.c.l.b16 %v148
    %v167 = vunpack.c.l.b16 %v149
    %v168 = vpack.c.b16 %v164, %v163
    %v169 = vpack.c.b16 %v166, %v165
    %v170 = vpack.c.b16 %v167, %v167
    %v179 = vunpack.c.l.b16 %v150
    %v180 = vunpack.c.l.b16 %v151
    %v181 = vunpack.c.l.b16 %v152
    %v182 = vunpack.c.l.b16 %v153
    %v183 = vunpack.c.l.b16 %v154
    %v184 = vunpack.c.l.b16 %v155
    %v185 = vunpack.c.l.b16 %v156
    %v186 = vunpack.c.l.b16 %v157
    %v187 = vpack.c.b16 %v180, %v179
    %v188 = vpack.c.b16 %v182, %v181
    %v189 = vpack.c.b16 %v184, %v183
    %v190 = vpack.c.b16 %v186, %v185
    %vm195 = vcmask 523264
    %v197 = vsel %vm195, %v168, 0
    %v200 = vsel %vm195, %v169, 0
    %v203 = vsel %vm195, %v170, 0
    %205 = vmatprep.subr.bf16.mxu0 0
    %206 = vmatpush1.bf16.msra.mxu0 %v187
    %207 = vmatprep.subr.bf16.mxu0 0
    %208 = vmatpush1.bf16.msra.mxu0 %v188
    %209 = vmatprep.subr.bf16.mxu0 0
    %210 = vmatpush1.bf16.msra.mxu0 %v189
    %211 = vmatprep.subr.bf16.mxu0 0
    %212 = vmatpush1.bf16.msra.mxu0 %v190
    %213 = vmatprep.subr.bf16.mxu0 0
    %214 = vmatpush1.bf16.msra.mxu0 0
    %215 = vmatprep.subr.bf16.mxu0 0
    %216 = vmatpush1.bf16.msra.mxu0 0
    %217 = vmatprep.subr.bf16.mxu0 0
    %218 = vmatpush1.bf16.msra.mxu0 0
    %219 = vmatprep.subr.bf16.mxu0 0
    %220 = vmatpush1.bf16.msra.mxu0 0
    %221 = vmatprep.subr.bf16.mxu0 0
    %222 = vmatpush1.bf16.msra.mxu0 0
    %223 = vmatprep.subr.bf16.mxu0 0
    %224 = vmatpush1.bf16.msra.mxu0 0
    %225 = vmatprep.subr.bf16.mxu0 0
    %226 = vmatpush1.bf16.msra.mxu0 0
    %227 = vmatprep.subr.bf16.mxu0 0
    %228 = vmatpush1.bf16.msra.mxu0 0
    %229 = vmatprep.subr.bf16.mxu0 0
    %230 = vmatpush1.bf16.msra.mxu0 0
    %231 = vmatprep.subr.bf16.mxu0 0
    %232 = vmatpush1.bf16.msra.mxu0 0
    %233 = vmatprep.subr.bf16.mxu0 0
    %234 = vmatpush1.bf16.msra.mxu0 0
    %235 = vmatprep.subr.bf16.mxu0 0
    %236 = vmatpush1.bf16.msra.mxu0 0
    %237 = vmatprep.mubr.bf16.mxu0 0
    %238 = vmatmul.mubr.bf16.gmra.mrb[0].mxu0 %v197
    %v239 = vpop.f32.mrb[0].mxu0
    %v240 = vadd.f32 0.0, %v239
    %v241 = vpop.f32.mrb[0].mxu0
    %v242 = vpop.f32.mrb[0].mxu0
    %v243 = vadd.f32 0.0, %v242
    %v244 = vpop.f32.mrb[0].mxu0
    %245 = vmatprep.mubr.bf16.mxu0 0
    %246 = vmatmul.mubr.bf16.gmra.mrb[0].mxu0 %v200
    %v247 = vpop.f32.mrb[0].mxu0
    %v248 = vadd.f32 0.0, %v247
    %v249 = vpop.f32.mrb[0].mxu0
    %v250 = vpop.f32.mrb[0].mxu0
    %v251 = vadd.f32 0.0, %v250
    %v252 = vpop.f32.mrb[0].mxu0
    %253 = vmatprep.mubr.bf16.mxu0 0
    %254 = vmatmul.mubr.bf16.gmra.mrb[0].mxu0 %v203
    %v255 = vpop.f32.mrb[0].mxu0
    %v256 = vadd.f32 0.0, %v255
    %v257 = vpop.f32.mrb[0].mxu0
    %v258 = vpop.f32.mrb[0].mxu0
    %v259 = vpop.f32.mrb[0].mxu0
    %260 = vdwg.mxu0
    %v261 = vadd.f32 %v143, %v240
    %v262 = vadd.f32 %v143, %v243
    %v263 = vadd.f32 %v143, %v248
    %v264 = vadd.f32 %v143, %v251
    %v265 = vadd.f32 %v143, %v256
    %v266 = vld [vmem:[#allocation2 + $0x10] sm:$0x3]
    %s267 = scalar_lea.vmem [#allocation6], 32
    %v268 = vld [vmem:[%s267] sm:$0xf]
    %v269 = vld [vmem:[%s267 + $0x4] sm:$0xf]
    %v270 = vld [vmem:[%s267 + $0x8] sm:$0xf]
    %v271 = vld [vmem:[%s267 + $0xc] sm:$0xf]
    %v272 = vld [vmem:[%s267 + $0x10] sm:$0xf]
    %v273 = vld [vmem:[%s267 + $0x14] sm:$0xf]
    %v274 = vld [vmem:[%s267 + $0x18] sm:$0xf]
    %v275 = vld [vmem:[%s267 + $0x1c] sm:$0xf]
    %v277 = vunpack.c.l.b16 %v266
    %v278 = vpack.c.b16 %v277, %v277
    %vm279 = vsmask.f32 7424
    %v280 = vshrl.u32 %v168, 16
    %v282 = vshll.u32 %v168, 16
    %v284 = vrot.slane %v282, 1
    %v285 = vor.u32 %v280, %v284
    %v286 = vshll.u32 %v169, 16
    %v288 = vrot.slane %v286, 1
    %v289 = vsel %vm279, %v285, %v288
    %v290 = vshrl.u32 %v169, 16
    %v292 = vor.u32 %v290, %v288
    %v294 = vshll.u32 %v278, 16
    %v296 = vrot.slane %v294, 1
    %v297 = vsel %vm279, %v292, %v296
    %v298 = vshrl.u32 %v278, 16
    %v300 = vor.u32 %v298, %v296
    %v309 = vunpack.c.l.b16 %v268
    %v310 = vunpack.c.l.b16 %v269
    %v311 = vunpack.c.l.b16 %v270
    %v312 = vunpack.c.l.b16 %v271
    %v313 = vunpack.c.l.b16 %v272
    %v314 = vunpack.c.l.b16 %v273
    %v315 = vunpack.c.l.b16 %v274
    %v316 = vunpack.c.l.b16 %v275
    %v317 = vpack.c.b16 %v310, %v309
    %v318 = vpack.c.b16 %v312, %v311
    %v319 = vpack.c.b16 %v314, %v313
    %v320 = vpack.c.b16 %v316, %v315
    %v326 = vsel %vm195, %v289, 0
    %v329 = vsel %vm195, %v297, 0
    %v332 = vsel %vm195, %v300, 0
    %334 = vmatprep.subr.bf16.mxu0 0
    %335 = vmatpush1.bf16.msra.mxu0 %v317
    %336 = vmatprep.subr.bf16.mxu0 0
    %337 = vmatpush1.bf16.msra.mxu0 %v318
    %338 = vmatprep.subr.bf16.mxu0 0
    %339 = vmatpush1.bf16.msra.mxu0 %v319
    %340 = vmatprep.subr.bf16.mxu0 0
    %341 = vmatpush1.bf16.msra.mxu0 %v320
    %342 = vmatprep.subr.bf16.mxu0 0
    %343 = vmatpush1.bf16.msra.mxu0 0
    %344 = vmatprep.subr.bf16.mxu0 0
    %345 = vmatpush1.bf16.msra.mxu0 0
    %346 = vmatprep.subr.bf16.mxu0 0
    %347 = vmatpush1.bf16.msra.mxu0 0
    %348 = vmatprep.subr.bf16.mxu0 0
    %349 = vmatpush1.bf16.msra.mxu0 0
    %350 = vmatprep.subr.bf16.mxu0 0
    %351 = vmatpush1.bf16.msra.mxu0 0
    %352 = vmatprep.subr.bf16.mxu0 0
    %353 = vmatpush1.bf16.msra.mxu0 0
    %354 = vmatprep.subr.bf16.mxu0 0
    %355 = vmatpush1.bf16.msra.mxu0 0
    %356 = vmatprep.subr.bf16.mxu0 0
    %357 = vmatpush1.bf16.msra.mxu0 0
    %358 = vmatprep.subr.bf16.mxu0 0
    %359 = vmatpush1.bf16.msra.mxu0 0
    %360 = vmatprep.subr.bf16.mxu0 0
    %361 = vmatpush1.bf16.msra.mxu0 0
    %362 = vmatprep.subr.bf16.mxu0 0
    %363 = vmatpush1.bf16.msra.mxu0 0
    %364 = vmatprep.subr.bf16.mxu0 0
    %365 = vmatpush1.bf16.msra.mxu0 0
    %366 = vmatprep.mubr.bf16.mxu0 0
    %367 = vmatmul.mubr.bf16.gmra.mrb[0].mxu0 %v326
    %v368 = vpop.f32.mrb[0].mxu0
    %v369 = vadd.f32 0.0, %v368
    %v370 = vpop.f32.mrb[0].mxu0
    %v371 = vpop.f32.mrb[0].mxu0
    %v372 = vadd.f32 0.0, %v371
    %v373 = vpop.f32.mrb[0].mxu0
    %374 = vmatprep.mubr.bf16.mxu0 0
    %375 = vmatmul.mubr.bf16.gmra.mrb[0].mxu0 %v329
    %v376 = vpop.f32.mrb[0].mxu0
    %v377 = vadd.f32 0.0, %v376
    %v378 = vpop.f32.mrb[0].mxu0
    %v379 = vpop.f32.mrb[0].mxu0
    %v380 = vadd.f32 0.0, %v379
    %v381 = vpop.f32.mrb[0].mxu0
    %382 = vmatprep.mubr.bf16.mxu0 0
    %383 = vmatmul.mubr.bf16.gmra.mrb[0].mxu0 %v332
    %v384 = vpop.f32.mrb[0].mxu0
    %v385 = vadd.f32 0.0, %v384
    %v386 = vpop.f32.mrb[0].mxu0
    %v387 = vpop.f32.mrb[0].mxu0
    %v388 = vpop.f32.mrb[0].mxu0
    %389 = vdwg.mxu0
    %v390 = vadd.f32 %v261, %v369
    %v391 = vadd.f32 %v262, %v372
    %v392 = vadd.f32 %v263, %v377
    %v393 = vadd.f32 %v264, %v380
    %v394 = vadd.f32 %v265, %v385
    %v395 = vld [vmem:[#allocation2] sm:$0xe]
    %s396 = scalar_lea.vmem [#allocation6], 64
    %v397 = vld [vmem:[%s396] sm:$0xf]
    %v398 = vld [vmem:[%s396 + $0x4] sm:$0xf]
    %v399 = vld [vmem:[%s396 + $0x8] sm:$0xf]
    %v400 = vld [vmem:[%s396 + $0xc] sm:$0xf]
    %v401 = vld [vmem:[%s396 + $0x10] sm:$0xf]
    %v402 = vld [vmem:[%s396 + $0x14] sm:$0xf]
    %v403 = vld [vmem:[%s396 + $0x18] sm:$0xf]
    %v404 = vld [vmem:[%s396 + $0x1c] sm:$0xf]
    %v406 = vunpack.c.l.b16 %v395
    %v407 = vpack.c.b16 %v164, %v406
    %vm408 = vcmask 1046528
    %v409 = vrot.slane %v407, 1
    %v410 = vrot.slane %v169, 1
    %v411 = vsel %vm408, %v409, %v410
    %v412 = vrot.slane %v278, 1
    %v413 = vsel %vm408, %v410, %v412
    %v422 = vunpack.c.l.b16 %v397
    %v423 = vunpack.c.l.b16 %v398
    %v424 = vunpack.c.l.b16 %v399
    %v425 = vunpack.c.l.b16 %v400
    %v426 = vunpack.c.l.b16 %v401
    %v427 = vunpack.c.l.b16 %v402
    %v428 = vunpack.c.l.b16 %v403
    %v429 = vunpack.c.l.b16 %v404
    %v430 = vpack.c.b16 %v423, %v422
    %v431 = vpack.c.b16 %v425, %v424
    %v432 = vpack.c.b16 %v427, %v426
    %v433 = vpack.c.b16 %v429, %v428
    %v439 = vsel %vm195, %v411, 0
    %v442 = vsel %vm195, %v413, 0
    %v445 = vsel %vm195, %v412, 0
    %447 = vmatprep.subr.bf16.mxu0 0
    %448 = vmatpush1.bf16.msra.mxu0 %v430
    %449 = vmatprep.subr.bf16.mxu0 0
    %450 = vmatpush1.bf16.msra.mxu0 %v431
    %451 = vmatprep.subr.bf16.mxu0 0
    %452 = vmatpush1.bf16.msra.mxu0 %v432
    %453 = vmatprep.subr.bf16.mxu0 0
    %454 = vmatpush1.bf16.msra.mxu0 %v433
    %455 = vmatprep.subr.bf16.mxu0 0
    %456 = vmatpush1.bf16.msra.mxu0 0
    %457 = vmatprep.subr.bf16.mxu0 0
    %458 = vmatpush1.bf16.msra.mxu0 0
    %459 = vmatprep.subr.bf16.mxu0 0
    %460 = vmatpush1.bf16.msra.mxu0 0
    %461 = vmatprep.subr.bf16.mxu0 0
    %462 = vmatpush1.bf16.msra.mxu0 0
    %463 = vmatprep.subr.bf16.mxu0 0
    %464 = vmatpush1.bf16.msra.mxu0 0
    %465 = vmatprep.subr.bf16.mxu0 0
    %466 = vmatpush1.bf16.msra.mxu0 0
    %467 = vmatprep.subr.bf16.mxu0 0
    %468 = vmatpush1.bf16.msra.mxu0 0
    %469 = vmatprep.subr.bf16.mxu0 0
    %470 = vmatpush1.bf16.msra.mxu0 0
    %471 = vmatprep.subr.bf16.mxu0 0
    %472 = vmatpush1.bf16.msra.mxu0 0
    %473 = vmatprep.subr.bf16.mxu0 0
    %474 = vmatpush1.bf16.msra.mxu0 0
    %475 = vmatprep.subr.bf16.mxu0 0
    %476 = vmatpush1.bf16.msra.mxu0 0
    %477 = vmatprep.subr.bf16.mxu0 0
    %478 = vmatpush1.bf16.msra.mxu0 0
    %479 = vmatprep.mubr.bf16.mxu0 0
    %480 = vmatmul.mubr.bf16.gmra.mrb[0].mxu0 %v439
    %v481 = vpop.f32.mrb[0].mxu0
    %v482 = vadd.f32 0.0, %v481
    %v483 = vpop.f32.mrb[0].mxu0
    %v484 = vpop.f32.mrb[0].mxu0
    %v485 = vadd.f32 0.0, %v484
    %v486 = vpop.f32.mrb[0].mxu0
    %487 = vmatprep.mubr.bf16.mxu0 0
    %488 = vmatmul.mubr.bf16.gmra.mrb[0].mxu0 %v442
    %v489 = vpop.f32.mrb[0].mxu0
    %v490 = vadd.f32 0.0, %v489
    %v491 = vpop.f32.mrb[0].mxu0
    %v492 = vpop.f32.mrb[0].mxu0
    %v493 = vadd.f32 0.0, %v492
    %v494 = vpop.f32.mrb[0].mxu0
    %495 = vmatprep.mubr.bf16.mxu0 0
    %496 = vmatmul.mubr.bf16.gmra.mrb[0].mxu0 %v445
    %v497 = vpop.f32.mrb[0].mxu0
    %v498 = vadd.f32 0.0, %v497
    %v499 = vpop.f32.mrb[0].mxu0
    %v500 = vpop.f32.mrb[0].mxu0
    %v501 = vpop.f32.mrb[0].mxu0
    %502 = vdwg.mxu0
    %v503 = vadd.f32 %v390, %v482
    %v504 = vadd.f32 %v391, %v485
    %v505 = vadd.f32 %v392, %v490
    %v506 = vadd.f32 %v393, %v493
    %v507 = vadd.f32 %v394, %v498
    %508 = vst [vmem:[#allocation8] sm:$0xff] %v503
    %509 = vst [vmem:[#allocation8 + $0x8] sm:$0xff] %v504
    %s510 = scalar_lea.vmem [#allocation8], 16
    %511 = vst [vmem:[%s510 - $0x2] sm:$0xfc] %v505
    %512 = vst [vmem:[%s510 + $0x6] sm:$0xff] %v506
    %513 = vst [vmem:[%s510 + $0xe] sm:$0x3] %v507
    // Predicated region
    $region22: #{tpu_custom_call.1} parent=1 // pred_check
      _
    $region23: #{tpu_custom_call.1} parent=1 // pred_check_branch
      %515 = sbr.rel (0) target = $region25
    $region24: #{tpu_custom_call.1} parent=1 // pred_region
      %s517 = ssub.s32 512, 512
      %518 = vsyncadd [#allocation5], %s517
      %s519 = sshll.u32 [#allocation8], 4
      %s520 = int_to_ptr.vmem [resolvable:$true] %s519
      %525 = dma.vmem_to_hbm [thread:$0]  %s520, 512, %s3, [#allocation5], 128, 128, 8
    $region25: #{tpu_custom_call.1} parent=1 // pred_fallthru
      _
    // Predicated region
    $region26: #{tpu_custom_call.1} parent=1 // pred_check
      _
    $region27: #{tpu_custom_call.1} parent=1 // pred_check_branch
      %527 = sbr.rel (0) target = $region29
    $region28: #{tpu_custom_call.1} parent=1 // pred_region
      %528 = dma.done [#allocation5], 512
    $region29: #{tpu_custom_call.1} parent=1 // pred_fallthru
      _
    %529 = vsyncpa [#allocation4], 1
    %530 = vsyncpa [#allocation7], 1
    %531 = vsyncpa [#allocation5], 1

</llo_original>
